<compile_context>
chip_gen: v5e
topology: v5e:2x2
jax: 0.10.0
libtpu: 0.0.40
codegen_flags: <defaults>
</compile_context>

<pallas_src>
import jax
import jax.numpy as jnp
from jax import lax
from jax.experimental import pallas as pl
from jax.experimental.pallas import tpu as pltpu

LANE = 128


def _round_up(x, m):
    return ((x + m - 1) // m) * m


def _pick_tile(B, block_b):
    # Keep >= ~4 grid steps when the batch allows it (v7x: 2 TCs x >=2 steps
    # each, so pipelining has something to overlap), rows a multiple of 8
    # sublanes, hard-capped at 8192 rows for v7x's 64 MiB VMEM.
    target = _round_up(max(pl.cdiv(B, 4), 8), 8)
    tb = min(int(block_b), 8192, target)
    return max(8, tb)


def _vmem_budget(tb):
    # x/out double buffers + in-kernel f32 temporaries at 128 lanes, + headroom.
    est = 8 * tb * LANE * 4
    return int(max(24 << 20, min(56 << 20, est + (4 << 20))))


# ---------------------------------------------------------------------------
# Dense path: arbitrary dense input (matches the nn.Module exactly).
# ---------------------------------------------------------------------------
def bigram_kernel(x_ref, w_ref, b_ref, o_ref):
    # logits = x @ W_t + b ; W_t is the (A_in, A_out_p) pre-transposed weight.
    logits = jnp.dot(x_ref[...], w_ref[...],
                     preferred_element_type=jnp.float32) + b_ref[...]

    # Numerically-stable softmax along the feature (lane) axis.
    m = jnp.max(logits, axis=1, keepdims=True)
    e = jnp.exp(logits - m)
    denom = jnp.sum(e, axis=1, keepdims=True)

    # EUP approximate reciprocal + one Newton refinement (~f32-exact, keeps
    # the divide off the VPU).
    inv = pl.reciprocal(denom, approx=True)
    inv = inv * (2.0 - denom * inv)

    o_ref[...] = (e * inv).astype(o_ref.dtype)


def bigram_net_forward(x, weight, bias, *, block_b=4096, slice_output=True):
    """x: (B, A_in); weight: (A_out, A_in) as in nn.Linear; bias: (A_out,)."""
    B, A_in = x.shape
    A_out, A_in_w = weight.shape
    assert A_in == A_in_w and bias.shape == (A_out,)

    A_out_p = _round_up(max(A_out, LANE), LANE)   # lane-dense output
    out_dtype = x.dtype

    tb = _pick_tile(B, block_b)
    grid = (pl.cdiv(B, tb),)

    # Tiny one-time weight/bias prep (few KiB; negligible HBM traffic).
    # Padded output columns get a huge negative bias -> exp() == 0 mass.
    w_t_p = jnp.zeros((A_in, A_out_p), weight.dtype).at[:, :A_out].set(weight.T)
    b_p = jnp.full((1, A_out_p), -1e30, jnp.float32).at[0, :A_out].set(
        bias.astype(jnp.float32))

    itemsize = jnp.dtype(x.dtype).itemsize
    cost = pl.CostEstimate(
        flops=2 * B * A_in * A_out_p + 6 * B * A_out_p,
        transcendentals=B * A_out_p,
        bytes_accessed=(B * A_in * itemsize
                        + A_in * A_out_p * jnp.dtype(weight.dtype).itemsize
                        + A_out_p * 4
                        + B * A_out_p * jnp.dtype(out_dtype).itemsize),
    )

    out_p = pl.pallas_call(
        bigram_kernel,
        out_shape=jax.ShapeDtypeStruct((B, A_out_p), out_dtype),
        grid_spec=pl.GridSpec(
            grid=grid,
            in_specs=[
                pl.BlockSpec((tb, A_in), lambda i: (i, 0)),        # x stream (unpadded)
                pl.BlockSpec((A_in, A_out_p), lambda i: (0, 0)),   # W_t (resident)
                pl.BlockSpec((1, A_out_p), lambda i: (0, 0)),      # bias (resident)
            ],
            out_specs=pl.BlockSpec((tb, A_out_p), lambda i: (i, 0)),
        ),
        compiler_params=pltpu.CompilerParams(
            dimension_semantics=("parallel",),
            vmem_limit_bytes=_vmem_budget(tb),
        ),
        cost_estimate=cost,
    )(x, w_t_p, b_p)

    if slice_output:
        return out_p[:, :A_out]
    return out_p


# ---------------------------------------------------------------------------
# One-hot fast path: integer bigram indices, gather from a precomputed
# softmax probability table (resident in VMEM).
# ---------------------------------------------------------------------------
def bigram_onehot_kernel(idx_ref, table_ref, o_ref):
    idx = idx_ref[...]                                           # (tb, 1) int32
    n_in = table_ref.shape[0]
    cols = lax.broadcasted_iota(jnp.int32, (idx.shape[0], n_in), 1)
    onehot = (cols == idx).astype(table_ref.dtype)               # (tb, n_in)
    o_ref[...] = jnp.dot(onehot, table_ref[...],
                         preferred_element_type=jnp.float32).astype(o_ref.dtype)


def bigram_net_forward_onehot(idx, weight, bias, *, block_b=4096,
                              slice_output=True):
    """Fast path for the actual bigram workload: out[n] = softmax(W[:, idx[n]] + b)."""
    (B,) = idx.shape
    A_out, A_in = weight.shape
    A_out_p = _round_up(max(A_out, LANE), LANE)
    A_in_p = _round_up(max(A_in, 8), 8)

    # Tiny precomputed probability table (~16 KiB): row i = softmax(W[:, i] + b).
    table = jax.nn.softmax(
        weight.T.astype(jnp.float32) + bias.astype(jnp.float32)[None, :], axis=1)
    table_p = jnp.zeros((A_in_p, A_out_p), jnp.float32).at[:A_in, :A_out].set(table)

    tb = _pick_tile(B, block_b)
    grid = (pl.cdiv(B, tb),)
    idx2d = idx.astype(jnp.int32).reshape(B, 1)

    cost = pl.CostEstimate(
        flops=2 * B * A_in_p * A_out_p,
        transcendentals=0,
        bytes_accessed=B * 4 + A_in_p * A_out_p * 4 + B * A_out_p * 4,
    )

    out_p = pl.pallas_call(
        bigram_onehot_kernel,
        out_shape=jax.ShapeDtypeStruct((B, A_out_p), jnp.float32),
        grid_spec=pl.GridSpec(
            grid=grid,
            in_specs=[
                pl.BlockSpec((tb, 1), lambda i: (i, 0)),            # indices stream
                pl.BlockSpec((A_in_p, A_out_p), lambda i: (0, 0)),  # table (resident)
            ],
            out_specs=pl.BlockSpec((tb, A_out_p), lambda i: (i, 0)),
        ),
        compiler_params=pltpu.CompilerParams(
            dimension_semantics=("parallel",),
            vmem_limit_bytes=_vmem_budget(tb),
        ),
        cost_estimate=cost,
    )(idx2d, table_p)

    if slice_output:
        return out_p[:, :A_out]
    return out_p


if __name__ == "__main__":
    alphabet_len = 27

    key = jax.random.PRNGKey(0)
    k_w, k_b, k_x, k_x2 = jax.random.split(key, 4)

    # Deterministic init mimicking nn.Linear's U(-1/sqrt(fan_in), 1/sqrt(fan_in))
    bound = 1.0 / jnp.sqrt(jnp.float32(alphabet_len))
    weight = jax.random.uniform(
        k_w, (alphabet_len, alphabet_len), jnp.float32, -bound, bound)
    bias = jax.random.uniform(k_b, (alphabet_len,), jnp.float32, -bound, bound)

    # --- small one-hot batch (matches how the bigram model is fed) ---
    batch = 8
    idx = jax.random.randint(k_x, (batch,), 0, alphabet_len)
    x = jax.nn.one_hot(idx, alphabet_len, dtype=jnp.float32)

    out = jax.block_until_ready(bigram_net_forward(x, weight, bias))
    ref = jax.nn.softmax(x @ weight.T + bias, axis=1)
    assert out.shape == (batch, alphabet_len)
    assert jnp.allclose(out, ref, atol=1e-5, rtol=1e-5)

    # --- larger batch exercising the multi-step parallel grid + ragged block ---
    batch2 = 1500
    idx2 = jax.random.randint(k_x2, (batch2,), 0, alphabet_len)
    x2 = jax.nn.one_hot(idx2, alphabet_len, dtype=jnp.float32)

    out2 = jax.block_until_ready(bigram_net_forward(x2, weight, bias))
    ref2 = jax.nn.softmax(x2 @ weight.T + bias, axis=1)
    assert out2.shape == (batch2, alphabet_len)
    assert jnp.allclose(out2, ref2, atol=1e-5, rtol=1e-5)

    # --- one-hot (integer index) fast path on the same workload ---
    out3 = jax.block_until_ready(bigram_net_forward_onehot(idx2, weight, bias))
    assert out3.shape == (batch2, alphabet_len)
    assert jnp.allclose(out3, ref2, atol=1e-5, rtol=1e-5)

    print("KERNEL_OK")
</pallas_src>

<mosaic_0001>
module attributes {stable_mosaic.version = 11 : i64} {
  func.func @bigram_kernel(%arg0: i32, %arg1: memref<8x27xf32, #tpu.memory_space<vmem>>, %arg2: memref<27x128xf32, #tpu.memory_space<vmem>>, %arg3: memref<1x128xf32, #tpu.memory_space<vmem>>, %arg4: memref<8x128xf32, #tpu.memory_space<vmem>>) attributes {dimension_semantics = [#tpu.dimension_semantics<parallel>], iteration_bounds = array<i64: 1>, scalar_prefetch = 0 : i64, scratch_operands = 0 : i64, tpu.core_type = #tpu.core_type<tc>, window_params = [{transform_indices = @transform_0, window_bounds = array<i64: 8, 27>}, {pipeline_mode = #tpu.pipeline_mode<synchronous>, transform_indices = @transform_1, window_bounds = array<i64: 27, 128>}, {pipeline_mode = #tpu.pipeline_mode<synchronous>, transform_indices = @transform_2, window_bounds = array<i64: 1, 128>}, {transform_indices = @transform_3, window_bounds = array<i64: 8, 128>}]} {
    %c0 = arith.constant 0 : index
    %c0_0 = arith.constant 0 : index
    %0 = vector.load %arg1[%c0, %c0_0] : memref<8x27xf32, #tpu.memory_space<vmem>>, vector<8x27xf32>
    %c0_1 = arith.constant 0 : index
    %c0_2 = arith.constant 0 : index
    %1 = vector.load %arg2[%c0_1, %c0_2] : memref<27x128xf32, #tpu.memory_space<vmem>>, vector<27x128xf32>
    %cst = arith.constant dense<0.000000e+00> : vector<8x128xf32>
    %2 = tpu.matmul %0, %1, %cst {dimension_numbers = #tpu.dot_dimension_numbers<[1], [0], [0], [1], [0, 0, 1, 1], [], []>} : vector<8x27xf32>, vector<27x128xf32>, vector<8x128xf32> -> vector<8x128xf32>
    %c0_3 = arith.constant 0 : index
    %c0_4 = arith.constant 0 : index
    %3 = vector.load %arg3[%c0_3, %c0_4] : memref<1x128xf32, #tpu.memory_space<vmem>>, vector<1x128xf32>
    %4 = vector.broadcast %3 : vector<1x128xf32> to vector<8x128xf32>
    %5 = arith.addf %2, %4 : vector<8x128xf32>
    %cst_5 = arith.constant dense<0xFF800000> : vector<8xf32>
    %6 = vector.multi_reduction <maximumf>, %5, %cst_5 [1] : vector<8x128xf32> to vector<8xf32>
    %7 = vector.shape_cast %6 : vector<8xf32> to vector<8x1xf32>
    %8 = vector.broadcast %7 : vector<8x1xf32> to vector<8x128xf32>
    %9 = arith.subf %5, %8 : vector<8x128xf32>
    %10 = math.exp %9 : vector<8x128xf32>
    %cst_6 = arith.constant dense<0.000000e+00> : vector<8xf32>
    %11 = vector.multi_reduction <add>, %10, %cst_6 [1] : vector<8x128xf32> to vector<8xf32>
    %12 = vector.shape_cast %11 : vector<8xf32> to vector<8x1xf32>
    %13 = tpu.reciprocal %12 {approx = true} : vector<8x1xf32> -> vector<8x1xf32>
    %14 = arith.mulf %12, %13 : vector<8x1xf32>
    %cst_7 = arith.constant 2.000000e+00 : f32
    %15 = vector.broadcast %cst_7 : f32 to vector<8x1xf32>
    %16 = arith.subf %15, %14 : vector<8x1xf32>
    %17 = arith.mulf %13, %16 : vector<8x1xf32>
    %18 = vector.broadcast %17 : vector<8x1xf32> to vector<8x128xf32>
    %19 = arith.mulf %10, %18 : vector<8x128xf32>
    %c0_8 = arith.constant 0 : index
    %c0_9 = arith.constant 0 : index
    %20 = vector.load %arg4[%c0_8, %c0_9] : memref<8x128xf32, #tpu.memory_space<vmem>>, vector<8x128xf32>
    tpu.vector_store %arg4[%c0_8, %c0_9], %19 {strides = array<i32>} : memref<8x128xf32, #tpu.memory_space<vmem>>, vector<8x128xf32>,
    return
  }
  func.func @transform_0(%arg0: i32) -> (i32, i32) {
    %c0_i32 = arith.constant 0 : i32
    %c0_i32_0 = arith.constant 0 : i32
    return %arg0, %c0_i32 : i32, i32
  }
  func.func @transform_1(%arg0: i32) -> (i32, i32) {
    %c0_i32 = arith.constant 0 : i32
    %c0_i32_0 = arith.constant 0 : i32
    %c0_i32_1 = arith.constant 0 : i32
    return %c0_i32, %c0_i32_0 : i32, i32
  }
  func.func @transform_2(%arg0: i32) -> (i32, i32) {
    %c0_i32 = arith.constant 0 : i32
    %c0_i32_0 = arith.constant 0 : i32
    %c0_i32_1 = arith.constant 0 : i32
    return %c0_i32, %c0_i32_0 : i32, i32
  }
  func.func @transform_3(%arg0: i32) -> (i32, i32) {
    %c0_i32 = arith.constant 0 : i32
    %c0_i32_0 = arith.constant 0 : i32
    return %arg0, %c0_i32 : i32, i32
  }
}

</mosaic_0001>

<llo_original>
// kernel: tpu_custom_call.1
$region0: #{tpu_custom_call.1}
  #allocation0 [shape = 'u32[]', space=smem, size = 0x4, offset = 0x4, fixed_abs, tag = 'smem constant byte address 0x4 - core index']
  #allocation1 [shape = 'u32[72,128]{1,0:T(1,128)}', space=vmem, size = 0x9000, scoped, tag = 'internal scratch']
  %s0 = inlined_call_operand.hbm [shape: f32[8,27], index: 0, kind: input, shape index: {}]
  %s1 = inlined_call_operand.hbm [shape: f32[27,128], index: 1, kind: input, shape index: {}]
  %s2 = inlined_call_operand.vmem [shape: f32[1,128], index: 2, kind: input, shape index: {}]
  %s3 = inlined_call_operand.hbm [shape: f32[8,128], index: 3, kind: output, shape index: {}]
  %s4 = sld [smem:[#allocation0]]
  $region30: #{tpu_custom_call.1} parent=0
    _
  %s6 = ssub.s32 1, %s4
  %s7 = scalar_select 0, %s6, %s4
  $region1: #{tpu_custom_call.1} parent=0
    #allocation2 [shape = 'u8[4096]{0}', space=vmem, size = 0x1000, scoped, tag = 'input window, operand 0, single buffered']
    #allocation3 [shape = 's32[1]{0}', space=sflag, size = 0x4, scoped, tag = 'scoped memory for tpu_custom_call.1']
    #allocation4 [shape = 's32[1]{0}', space=sflag, size = 0x4, scoped, tag = 'scoped memory for tpu_custom_call.1']
    #allocation5 [shape = 'u8[16384]{0}', space=vmem, size = 0x4000, scoped, tag = 'input window, operand 1, single buffered']
    #allocation6 [shape = 's32[1]{0}', space=sflag, size = 0x4, scoped, tag = 'scoped memory for tpu_custom_call.1']
    #allocation7 [shape = 'u8[4096]{0}', space=vmem, size = 0x1000, scoped, tag = 'output window, operand 0, single buffered']
    %8 = vsyncpa [#allocation3], 0
    %9 = vsyncpa [#allocation6], 0
    %10 = vsyncpa [#allocation4], 0
    // Predicated region
    $region2: #{tpu_custom_call.1} parent=1 // pred_check
      _
    $region3: #{tpu_custom_call.1} parent=1 // pred_check_branch
      %12 = sbr.rel (0) target = $region5
    $region4: #{tpu_custom_call.1} parent=1 // pred_region
      %14 = vsyncadd [#allocation3], 0
      %s16 = sshll.u32 %s0, 4
      %s17 = int_to_ptr.hbm [resolvable:$true] %s16
      %s18 = sshll.u32 [#allocation2], 4
      %s19 = int_to_ptr.vmem [resolvable:$true] %s18
      %21 = dma.hbm_to_vmem [thread:$0]  %s17, 128, %s19, [#allocation3]
    $region5: #{tpu_custom_call.1} parent=1 // pred_fallthru
      _
    // Predicated region
    $region6: #{tpu_custom_call.1} parent=1 // pred_check
      _
    $region7: #{tpu_custom_call.1} parent=1 // pred_check_branch
      %23 = sbr.rel (0) target = $region9
    $region8: #{tpu_custom_call.1} parent=1 // pred_region
      %25 = vsyncadd [#allocation6], 0
      %s26 = sshll.u32 %s1, 4
      %s27 = int_to_ptr.hbm [resolvable:$true] %s26
      %s28 = sshll.u32 [#allocation5], 4
      %s29 = int_to_ptr.vmem [resolvable:$true] %s28
      %34 = dma.hbm_to_vmem [thread:$0]  %s27, 512, %s29, [#allocation6], 128, 128, 8
    $region9: #{tpu_custom_call.1} parent=1 // pred_fallthru
      _
    // Predicated region
    $region10: #{tpu_custom_call.1} parent=1 // pred_check
      _
    $region11: #{tpu_custom_call.1} parent=1 // pred_check_branch
      %36 = sbr.rel (0) target = $region13
    $region12: #{tpu_custom_call.1} parent=1 // pred_region
      _
    $region13: #{tpu_custom_call.1} parent=1 // pred_fallthru
      _
    // Predicated region
    $region14: #{tpu_custom_call.1} parent=1 // pred_check
      _
    $region15: #{tpu_custom_call.1} parent=1 // pred_check_branch
      %38 = sbr.rel (0) target = $region17
    $region16: #{tpu_custom_call.1} parent=1 // pred_region
      %40 = dma.done [#allocation3], 128
    $region17: #{tpu_custom_call.1} parent=1 // pred_fallthru
      _
    // Predicated region
    $region18: #{tpu_custom_call.1} parent=1 // pred_check
      _
    $region19: #{tpu_custom_call.1} parent=1 // pred_check_branch
      %42 = sbr.rel (0) target = $region21
    $region20: #{tpu_custom_call.1} parent=1 // pred_region
      %44 = dma.done [#allocation6], 512
    $region21: #{tpu_custom_call.1} parent=1 // pred_fallthru
      _
    %v45 = vld [vmem:[#allocation2] sm:$0xff]
    %v46 = vld [vmem:[#allocation5] sm:$0xff]
    %v47 = vld [vmem:[#allocation5 + $0x8] sm:$0xff]
    %v48 = vld [vmem:[#allocation5 + $0x10] sm:$0xff]
    %v49 = vld [vmem:[#allocation5 + $0x18] sm:$0x7]
    %v50 = vld [vmem:[%s2] sm:$0x1]
    %v52 = vperm.slane %v50, 0
    %vm54 = vcmask 220160
    %v56 = vsel %vm54, %v45, 0
    %vm58 = vcmask 1042432
    %v60 = vsel %vm58, %v49, 0
    %62 = vmatpush.msra.mxu0 0.0
    %63 = vmatpush.msra.mxu0 0.0
    %64 = vmatpush.msra.mxu0 0.0
    %65 = vmatpush.msra.mxu0 0.0
    %66 = vmatpush.msra.mxu0 0.0
    %67 = vmatpush.msra.mxu0 0.0
    %68 = vmatpush.msra.mxu0 0.0
    %69 = vmatpush.msra.mxu0 0.0
    %70 = vmatpush.msra.mxu0 0.0
    %71 = vmatpush.msra.mxu0 0.0
    %72 = vmatpush.msra.mxu0 0.0
    %73 = vmatpush.msra.mxu0 0.0
    %74 = vmatpush.msra.mxu0 %v60
    %75 = vmatpush.msra.mxu0 %v48
    %76 = vmatpush.msra.mxu0 %v47
    %77 = vmatpush.msra.mxu0 %v46
    %78 = vmatmul.f32.gmra.mxu0 %v56
    %v79 = vpop.f32.mrf.mxu0
    %v80 = vadd.f32 %v52, %v79
    %81 = vdwg.mxu0
    %82 = vmax.xlane.f32.xlu0 %v80
    %v83 = vpop.xlane.xlu0 %82
    %v84 = vsub.f32 %v80, %v83
    %v85 = vmul.f32 %v84, 1.442695
    %v86 = vpow.pop %v85
    %87 = vadd.xlane.f32.xlu0 %v86
    %v88 = vpop.xlane.xlu0 %87
    %v89 = vrcp.pop %v88
    %v90 = vmul.f32 %v88, %v89
    %v91 = vsub.f32 2.0, %v90
    %v92 = vmul.f32 %v89, %v91
    %v93 = vmul.f32 %v86, %v92
    %94 = vst [vmem:[#allocation7] sm:$0xff] %v93
    // Predicated region
    $region22: #{tpu_custom_call.1} parent=1 // pred_check
      _
    $region23: #{tpu_custom_call.1} parent=1 // pred_check_branch
      %96 = sbr.rel (0) target = $region25
    $region24: #{tpu_custom_call.1} parent=1 // pred_region
      %98 = vsyncadd [#allocation4], 0
      %s100 = sshll.u32 [#allocation7], 4
      %s101 = int_to_ptr.vmem [resolvable:$true] %s100
      %s102 = sshll.u32 %s3, 4
      %s103 = int_to_ptr.hbm [resolvable:$true] %s102
      %105 = dma.vmem_to_hbm [thread:$0]  %s101, 128, %s103, [#allocation4]
    $region25: #{tpu_custom_call.1} parent=1 // pred_fallthru
      _
    // Predicated region
    $region26: #{tpu_custom_call.1} parent=1 // pred_check
      _
    $region27: #{tpu_custom_call.1} parent=1 // pred_check_branch
      %107 = sbr.rel (0) target = $region29
    $region28: #{tpu_custom_call.1} parent=1 // pred_region
      %109 = dma.done [#allocation4], 128
    $region29: #{tpu_custom_call.1} parent=1 // pred_fallthru
      _
    %110 = vsyncpa [#allocation3], 1
    %111 = vsyncpa [#allocation6], 1
    %112 = vsyncpa [#allocation4], 1

</llo_original>
